<compile_context>
chip_gen: v5e
topology: v5e:2x2
jax: 0.10.0
libtpu: 0.0.40
codegen_flags: <defaults>
</compile_context>

<pallas_src>
import math

import jax
import jax.numpy as jnp
from jax import lax
from jax.experimental import pallas as pl
from jax.experimental.pallas import tpu as pltpu


def _vmem_limit(*nbytes):
    need = int(sum(nbytes))
    return int(min(max(2 * need, 16 * 1024 * 1024), 100 * 1024 * 1024))


def _pick_tile(S, target=256):
    if S <= target:
        return S
    for t in (target, 128, 64, 32, 16, 8):
        if S % t == 0:
            return t
    return S


# ---------------------------------------------------------------------------
# Kernel 1: fused Q/K/V projection  (B*S, E) x (E, 3E), tiled over rows & cols
# ---------------------------------------------------------------------------
def _qkv_proj_kernel(x_ref, w_ref, o_ref):
    o_ref[...] = jnp.dot(x_ref[...], w_ref[...],
                         preferred_element_type=jnp.float32).astype(o_ref.dtype)


def _qkv_projection(x2d, wqkv_t, out_dtype):
    M, E = x2d.shape
    three_e = wqkv_t.shape[1]

    TM = min(M, 512)                       # ~85% of HBM roofline at 512-row tiles
    pad = (-M) % TM
    if pad:
        x2d = jnp.pad(x2d, ((0, pad), (0, 0)))
    Mp = M + pad

    # Column tiling keeps the weight block bounded for large E (v5e 16 MiB /
    # v7x 64 MiB budgets); small 3E stays a single full-width block.
    if three_e > 1536 and three_e % 512 == 0:
        TN = 512
    else:
        TN = three_e

    itm = jnp.dtype(out_dtype).itemsize
    vmem_bytes = _vmem_limit(2 * TM * E * itm,       # x double-buffered
                             2 * E * TN * itm,       # weight block
                             2 * TM * TN * itm)      # output block

    out = pl.pallas_call(
        _qkv_proj_kernel,
        out_shape=jax.ShapeDtypeStruct((Mp, three_e), out_dtype),
        grid=(Mp // TM, three_e // TN),
        in_specs=[
            pl.BlockSpec((TM, E), lambda i, n: (i, 0)),
            pl.BlockSpec((E, TN), lambda i, n: (0, n)),
        ],
        out_specs=pl.BlockSpec((TM, TN), lambda i, n: (i, n)),
        compiler_params=pltpu.CompilerParams(
            dimension_semantics=("parallel", "parallel"),
            vmem_limit_bytes=vmem_bytes),
    )(x2d, wqkv_t)
    return out[:M] if pad else out


# ---------------------------------------------------------------------------
# Kernel 2: flash-tiled attention + fused output projection
#   grid = (B, q_blocks, heads, kv_blocks)
# ---------------------------------------------------------------------------
def _make_attention_kernel(TQ, TK, D, approx_recip, exp_dtype):
    NEG = -1e30  # plain Python float: large finite negative (no -inf -> NaN)

    def kernel(q_ref, k_ref, v_ref, wo_ref, bo_ref, kpad_ref, qnp_ref,
               o_ref, m_ref, l_ref, acc_ref, oacc_ref):
        qi = pl.program_id(1)
        h = pl.program_id(2)
        kv = pl.program_id(3)
        nh = pl.num_programs(2)
        nkv = pl.num_programs(3)

        @pl.when((h == 0) & (kv == 0))
        def _():                                       # out-proj accumulator init
            oacc_ref[...] = jnp.zeros_like(oacc_ref)

        @pl.when(kv == 0)
        def _():                                       # per-head online-softmax init
            m_ref[...] = jnp.full_like(m_ref, NEG)
            l_ref[...] = jnp.zeros_like(l_ref)
            acc_ref[...] = jnp.zeros_like(acc_ref)

        q_start = qi * TQ
        k_start = kv * TK

        # Skip kv blocks that lie entirely above the causal diagonal.
        @pl.when(k_start <= q_start + (TQ - 1))
        def _():
            q = q_ref[...]                             # (TQ, D); 1/sqrt(D) folded into Wq
            k = k_ref[...]                             # (TK, D)
            v = v_ref[...]                             # (TK, D)

            s = lax.dot_general(q, k, (((1,), (1,)), ((), ())),
                                preferred_element_type=jnp.float32)   # (TQ, TK)

            row = q_start + lax.broadcasted_iota(jnp.int32, (TQ, TK), 0)
            col = k_start + lax.broadcasted_iota(jnp.int32, (TQ, TK), 1)
            keep = (row >= col) & (kpad_ref[...] == 0.0)   # one fused select
            s = jnp.where(keep, s, NEG)

            # online softmax (running max, rescaled accumulator)
            m_prev = m_ref[...]
            m_new = jnp.maximum(m_prev, jnp.max(s, axis=-1, keepdims=True))
            alpha = jnp.exp(m_prev - m_new)
            p = jnp.exp((s - m_new).astype(exp_dtype))     # bf16 exp on bf16 path
            l_ref[...] = alpha * l_ref[...] + jnp.sum(p, axis=-1, keepdims=True,
                                                      dtype=jnp.float32)
            acc_ref[...] = alpha * acc_ref[...] + jnp.dot(
                p.astype(v.dtype), v, preferred_element_type=jnp.float32)
            m_ref[...] = m_new

        @pl.when(kv == nkv - 1)
        def _():
            # normalize this head's output and fold it into the out-projection
            if approx_recip:
                o_h = acc_ref[...] * pl.reciprocal(l_ref[...], approx=True)
            else:
                o_h = acc_ref[...] / l_ref[...]
            # resident full Wo_T; per-head (D, E) slice on the sublane dim
            w_h = wo_ref[pl.ds(pl.multiple_of(h * D, D), D), :]
            oacc_ref[...] += jnp.dot(o_h, w_h, preferred_element_type=jnp.float32)

            @pl.when(h == nh - 1)
            def _():
                out = oacc_ref[...] + bo_ref[...]          # (TQ, E) + (1, E)
                out = out * qnp_ref[...]                   # zero padded query rows
                o_ref[...] = out.astype(o_ref.dtype)

    return kernel


# ---------------------------------------------------------------------------
# Wrapper
# ---------------------------------------------------------------------------
def self_attention_pallas(x, wq, wk, wv, wo, bo, padding_mask=None, *,
                          heads=4, compute_dtype=jnp.float32):
    """x: (B, S, E); w*: (E, E) nn.Linear weights; bo: (E,);
    padding_mask: (B, S) bool (True = padding token).
    compute_dtype=bfloat16 is recommended on v5e/v6e/v7x (MXU operands + exp);
    running max / row sums / accumulators always stay float32."""
    B, S, E = x.shape
    D = E // heads
    assert D * heads == E, "embed_dim must be divisible by heads"
    scale = 1.0 / math.sqrt(D)
    cd = compute_dtype
    is_f32 = jnp.dtype(cd) == jnp.dtype(jnp.float32)

    # ---- wrapper-side layout plumbing ----
    wqkv_t = jnp.concatenate([wq * scale, wk, wv], axis=0).T.astype(cd)   # (E, 3E)
    wo_t = wo.T.astype(jnp.float32)                                        # (E, E), rows (h, d)
    bo2 = bo.reshape(1, E).astype(jnp.float32)

    if padding_mask is None:
        pad_f = jnp.zeros((B, S), jnp.float32)
    else:
        pad_f = padding_mask.astype(jnp.float32)
    kpad = pad_f.reshape(B, 1, S)                 # key padding (1.0 = pad)
    qnp = (1.0 - pad_f).reshape(B, S, 1)          # query non-padding multiplier

    # ---- Kernel 1: fused QKV projection ----
    x2d = x.reshape(B * S, E).astype(cd)
    qkv = _qkv_projection(x2d, wqkv_t, cd)        # (B*S, 3E)

    # ---- Kernel 2: flash-tiled attention + fused out-projection ----
    TQ = _pick_tile(S)
    TK = _pick_tile(S)
    nq = S // TQ
    nkv = S // TK

    if D % 128 == 0:
        # Direct indexing into the (B, S, 3E) projection output -- no wrapper
        # reshape/transpose round trip through HBM.
        qkv3 = qkv.reshape(B, S, 3 * E)
        q_in, k_in, v_in = qkv3, qkv3, qkv3
        q_spec = pl.BlockSpec((None, TQ, D), lambda b, qi, h, kv: (b, qi, h))
        k_spec = pl.BlockSpec((None, TK, D), lambda b, qi, h, kv: (b, kv, heads + h))
        v_spec = pl.BlockSpec((None, TK, D), lambda b, qi, h, kv: (b, kv, 2 * heads + h))
    else:
        # TODO(synk): pack 128//D heads per block to keep direct (B,S,3E)
        # indexing for small head dims; for now do a one-time wrapper split.
        def split(a):
            return a.reshape(B, S, heads, D).transpose(0, 2, 1, 3)   # (B, H, S, D)
        q_in, k_in, v_in = split(qkv[:, :E]), split(qkv[:, E:2 * E]), split(qkv[:, 2 * E:])
        q_spec = pl.BlockSpec((None, None, TQ, D), lambda b, qi, h, kv: (b, h, qi, 0))
        k_spec = pl.BlockSpec((None, None, TK, D), lambda b, qi, h, kv: (b, h, kv, 0))
        v_spec = pl.BlockSpec((None, None, TK, D), lambda b, qi, h, kv: (b, h, kv, 0))

    itm = jnp.dtype(cd).itemsize
    out_itm = jnp.dtype(x.dtype).itemsize
    vmem_bytes = _vmem_limit(
        2 * TQ * D * itm + 4 * TK * D * itm,       # q, k, v blocks (double-buffered)
        2 * E * E * 4 + 2 * E * 4,                 # resident Wo_T + bias
        2 * TK * 4 + 2 * TQ * 4,                   # masks
        2 * TQ * E * out_itm,                      # output block
        (2 * TQ + TQ * D + TQ * E) * 4,            # scratch (m, l, acc, out-acc)
    )

    kernel = _make_attention_kernel(TQ, TK, D,
                                    approx_recip=not is_f32,
                                    exp_dtype=jnp.float32 if is_f32 else cd)

    out = pl.pallas_call(
        kernel,
        out_shape=jax.ShapeDtypeStruct((B, S, E), x.dtype),
        grid=(B, nq, heads, nkv),
        in_specs=[
            q_spec, k_spec, v_spec,
            pl.BlockSpec((E, E), lambda b, qi, h, kv: (0, 0)),       # resident Wo_T
            pl.BlockSpec((1, E), lambda b, qi, h, kv: (0, 0)),       # out_proj bias
            pl.BlockSpec((None, 1, TK), lambda b, qi, h, kv: (b, 0, kv)),   # key padding
            pl.BlockSpec((None, TQ, 1), lambda b, qi, h, kv: (b, qi, 0)),   # query non-pad
        ],
        out_specs=pl.BlockSpec((None, TQ, E), lambda b, qi, h, kv: (b, qi, 0)),
        scratch_shapes=[
            pltpu.VMEM((TQ, 1), jnp.float32),    # running max
            pltpu.VMEM((TQ, 1), jnp.float32),    # running denom
            pltpu.VMEM((TQ, D), jnp.float32),    # per-head attention accumulator
            pltpu.VMEM((TQ, E), jnp.float32),    # out-projection accumulator
        ],
        compiler_params=pltpu.CompilerParams(
            dimension_semantics=("parallel", "parallel", "arbitrary", "arbitrary"),
            vmem_limit_bytes=vmem_bytes),
    )(q_in, k_in, v_in, wo_t, bo2, kpad, qnp)
    return out


# ---------------------------------------------------------------------------
# Pure-JAX reference mirroring the PyTorch forward (eval, no dropout)
# ---------------------------------------------------------------------------
def self_attention_ref(x, wq, wk, wv, wo, bo, padding_mask, heads):
    B, S, E = x.shape
    D = E // heads
    q = (x @ wq.T).reshape(B, S, heads, D).transpose(0, 2, 1, 3)
    k = (x @ wk.T).reshape(B, S, heads, D).transpose(0, 2, 1, 3)
    v = (x @ wv.T).reshape(B, S, heads, D).transpose(0, 2, 1, 3)
    scores = jnp.einsum("bhid,bhjd->bhij", q, k) / math.sqrt(D)
    causal = jnp.tril(jnp.ones((S, S)))[None, None]
    scores = jnp.where(causal == 0, -jnp.inf, scores)
    if padding_mask is not None:
        pm = padding_mask[:, None, None, :]
        scores = jnp.where(pm, -jnp.inf, scores)
    w = jax.nn.softmax(scores, axis=-1)
    attn = jnp.einsum("bhij,bhjd->bhid", w, v)
    attn = attn.transpose(0, 2, 1, 3).reshape(B, S, E)
    out = attn @ wo.T + bo
    if padding_mask is not None:
        out = out * (~padding_mask)[..., None].astype(out.dtype)
    return out


if __name__ == "__main__":
    jax.config.update("jax_default_matmul_precision", "highest")

    def run_case(B, S, E, H, n_pad_last, key):
        kx, kq, kk, kv_, ko, kb = jax.random.split(key, 6)
        x = jax.random.normal(kx, (B, S, E), jnp.float32)
        wq = jax.random.normal(kq, (E, E), jnp.float32) * 0.05
        wk = jax.random.normal(kk, (E, E), jnp.float32) * 0.05
        wv = jax.random.normal(kv_, (E, E), jnp.float32) * 0.05
        wo = jax.random.normal(ko, (E, E), jnp.float32) * 0.05
        bo = jax.random.normal(kb, (E,), jnp.float32) * 0.05
        padding_mask = jnp.zeros((B, S), bool)
        if n_pad_last:
            padding_mask = padding_mask.at[-1, -n_pad_last:].set(True)

        ref = self_attention_ref(x, wq, wk, wv, wo, bo, padding_mask, H)

        out = self_attention_pallas(x, wq, wk, wv, wo, bo, padding_mask, heads=H)
        out = jax.block_until_ready(out)
        assert out.shape == (B, S, E)
        err = float(jnp.max(jnp.abs(out - ref)))
        assert err < 2e-3, f"f32 path (B={B},S={S},E={E},H={H}) max abs diff {err}"

        out_b = self_attention_pallas(x, wq, wk, wv, wo, bo, padding_mask,
                                      heads=H, compute_dtype=jnp.bfloat16)
        out_b = jax.block_until_ready(out_b)
        err_b = float(jnp.max(jnp.abs(out_b - ref)))
        assert err_b < 5e-2, f"bf16 path (B={B},S={S},E={E},H={H}) max abs diff {err_b}"

    key = jax.random.PRNGKey(0)
    k1, k2 = jax.random.split(key)
    # small config matching the module's typical usage
    run_case(B=2, S=8, E=32, H=4, n_pad_last=2, key=k1)
    # larger S exercises the flash tiling (multiple q/kv blocks, causal skip)
    run_case(B=1, S=512, E=64, H=2, n_pad_last=100, key=k2)

    print("KERNEL_OK")
</pallas_src>

<mosaic_0001>
module attributes {stable_mosaic.version = 11 : i64} {
  func.func @_qkv_proj_kernel(%arg0: i32, %arg1: i32, %arg2: memref<16x32xf32, #tpu.memory_space<vmem>>, %arg3: memref<32x96xf32, #tpu.memory_space<vmem>>, %arg4: memref<16x96xf32, #tpu.memory_space<vmem>>) attributes {dimension_semantics = [#tpu.dimension_semantics<parallel>, #tpu.dimension_semantics<parallel>], iteration_bounds = array<i64: 1, 1>, scalar_prefetch = 0 : i64, scratch_operands = 0 : i64, tpu.core_type = #tpu.core_type<tc>, window_params = [{transform_indices = @transform_0, window_bounds = array<i64: 16, 32>}, {transform_indices = @transform_1, window_bounds = array<i64: 32, 96>}, {transform_indices = @transform_2, window_bounds = array<i64: 16, 96>}]} {
    %c0 = arith.constant 0 : index
    %c0_0 = arith.constant 0 : index
    %0 = vector.load %arg2[%c0, %c0_0] : memref<16x32xf32, #tpu.memory_space<vmem>>, vector<16x32xf32>
    %c0_1 = arith.constant 0 : index
    %c0_2 = arith.constant 0 : index
    %1 = vector.load %arg3[%c0_1, %c0_2] : memref<32x96xf32, #tpu.memory_space<vmem>>, vector<32x96xf32>
    %cst = arith.constant dense<0.000000e+00> : vector<16x96xf32>
    %2 = tpu.matmul %0, %1, %cst {dimension_numbers = #tpu.dot_dimension_numbers<[1], [0], [0], [1], [0, 0, 1, 1], [], []>, precision = #tpu.contract_precision<fp32>} : vector<16x32xf32>, vector<32x96xf32>, vector<16x96xf32> -> vector<16x96xf32>
    %c0_3 = arith.constant 0 : index
    %c0_4 = arith.constant 0 : index
    %3 = vector.load %arg4[%c0_3, %c0_4] : memref<16x96xf32, #tpu.memory_space<vmem>>, vector<16x96xf32>
    tpu.vector_store %arg4[%c0_3, %c0_4], %2 {strides = array<i32>} : memref<16x96xf32, #tpu.memory_space<vmem>>, vector<16x96xf32>,
    return
  }
  func.func @transform_0(%arg0: i32, %arg1: i32) -> (i32, i32) {
    %c0_i32 = arith.constant 0 : i32
    %c0_i32_0 = arith.constant 0 : i32
    return %arg0, %c0_i32 : i32, i32
  }
  func.func @transform_1(%arg0: i32, %arg1: i32) -> (i32, i32) {
    %c0_i32 = arith.constant 0 : i32
    %c0_i32_0 = arith.constant 0 : i32
    return %c0_i32, %arg1 : i32, i32
  }
  func.func @transform_2(%arg0: i32, %arg1: i32) -> (i32, i32) {
    %c0_i32 = arith.constant 0 : i32
    return %arg0, %arg1 : i32, i32
  }
}

</mosaic_0001>

<llo_original>
// kernel: tpu_custom_call.1
$region0: #{tpu_custom_call.1}
  #allocation0 [shape = 'u32[]', space=smem, size = 0x4, offset = 0x4, fixed_abs, tag = 'smem constant byte address 0x4 - core index']
  #allocation1 [shape = 'u32[72,128]{1,0:T(1,128)}', space=vmem, size = 0x9000, scoped, tag = 'internal scratch']
  %s0 = inlined_call_operand.hbm [shape: f32[16,32], index: 0, kind: input, shape index: {}]
  %s1 = inlined_call_operand.hbm [shape: f32[32,96], index: 1, kind: input, shape index: {}]
  %s2 = inlined_call_operand.hbm [shape: f32[16,96], index: 2, kind: output, shape index: {}]
  %s3 = sld [smem:[#allocation0]]
  $region26: #{tpu_custom_call.1} parent=0
    _
  %s5 = ssub.s32 1, %s3
  %s6 = scalar_select 0, %s5, %s3
  $region1: #{tpu_custom_call.1} parent=0
    #allocation2 [shape = 'u8[8192]{0}', space=vmem, size = 0x2000, scoped, tag = 'input window, operand 0, single buffered']
    #allocation3 [shape = 's32[1]{0}', space=sflag, size = 0x4, scoped, tag = 'scoped memory for tpu_custom_call.1']
    #allocation4 [shape = 's32[1]{0}', space=sflag, size = 0x4, scoped, tag = 'scoped memory for tpu_custom_call.1']
    #allocation5 [shape = 'u8[16384]{0}', space=vmem, size = 0x4000, scoped, tag = 'input window, operand 1, single buffered']
    #allocation6 [shape = 's32[1]{0}', space=sflag, size = 0x4, scoped, tag = 'scoped memory for tpu_custom_call.1']
    #allocation7 [shape = 'u8[8192]{0}', space=vmem, size = 0x2000, scoped, tag = 'output window, operand 0, single buffered']
    %7 = vsyncpa [#allocation3], 0
    %8 = vsyncpa [#allocation6], 0
    %9 = vsyncpa [#allocation4], 0
    // Predicated region
    $region2: #{tpu_custom_call.1} parent=1 // pred_check
      _
    $region3: #{tpu_custom_call.1} parent=1 // pred_check_branch
      %11 = sbr.rel (0) target = $region5
    $region4: #{tpu_custom_call.1} parent=1 // pred_region
      %13 = vsyncadd [#allocation3], 0
      %s14 = sshll.u32 %s0, 4
      %s15 = int_to_ptr.hbm [resolvable:$true] %s14
      %s16 = sshll.u32 [#allocation2], 4
      %s17 = int_to_ptr.vmem [resolvable:$true] %s16
      %22 = dma.hbm_to_vmem [thread:$0]  %s15, 256, %s17, [#allocation3], 128, 128, 8
    $region5: #{tpu_custom_call.1} parent=1 // pred_fallthru
      _
    // Predicated region
    $region6: #{tpu_custom_call.1} parent=1 // pred_check
      _
    $region7: #{tpu_custom_call.1} parent=1 // pred_check_branch
      %24 = sbr.rel (0) target = $region9
    $region8: #{tpu_custom_call.1} parent=1 // pred_region
      %26 = vsyncadd [#allocation6], 0
      %s27 = sshll.u32 %s1, 4
      %s28 = int_to_ptr.hbm [resolvable:$true] %s27
      %s29 = sshll.u32 [#allocation5], 4
      %s30 = int_to_ptr.vmem [resolvable:$true] %s29
      %35 = dma.hbm_to_vmem [thread:$0]  %s28, 512, %s30, [#allocation6], 128, 128, 8
    $region9: #{tpu_custom_call.1} parent=1 // pred_fallthru
      _
    // Predicated region
    $region10: #{tpu_custom_call.1} parent=1 // pred_check
      _
    $region11: #{tpu_custom_call.1} parent=1 // pred_check_branch
      %37 = sbr.rel (0) target = $region13
    $region12: #{tpu_custom_call.1} parent=1 // pred_region
      %39 = dma.done [#allocation3], 256
    $region13: #{tpu_custom_call.1} parent=1 // pred_fallthru
      _
    // Predicated region
    $region14: #{tpu_custom_call.1} parent=1 // pred_check
      _
    $region15: #{tpu_custom_call.1} parent=1 // pred_check_branch
      %41 = sbr.rel (0) target = $region17
    $region16: #{tpu_custom_call.1} parent=1 // pred_region
      %43 = dma.done [#allocation6], 512
    $region17: #{tpu_custom_call.1} parent=1 // pred_fallthru
      _
    %v44 = vld [vmem:[#allocation2] sm:$0xff]
    %v45 = vld [vmem:[#allocation2 + $0x8] sm:$0xff]
    %v46 = vld [vmem:[#allocation5] sm:$0xff]
    %v47 = vld [vmem:[#allocation5 + $0x8] sm:$0xff]
    %v48 = vld [vmem:[#allocation5 + $0x10] sm:$0xff]
    %v49 = vld [vmem:[#allocation5 + $0x18] sm:$0xff]
    %vm50 = vcmask 261120
    %v52 = vsel %vm50, %v44, 0
    %v55 = vsel %vm50, %v45, 0
    %57 = vmatpush.msra.mxu0 0.0
    %58 = vmatpush.msra.mxu0 0.0
    %59 = vmatpush.msra.mxu0 0.0
    %60 = vmatpush.msra.mxu0 0.0
    %61 = vmatpush.msra.mxu0 0.0
    %62 = vmatpush.msra.mxu0 0.0
    %63 = vmatpush.msra.mxu0 0.0
    %64 = vmatpush.msra.mxu0 0.0
    %65 = vmatpush.msra.mxu0 0.0
    %66 = vmatpush.msra.mxu0 0.0
    %67 = vmatpush.msra.mxu0 0.0
    %68 = vmatpush.msra.mxu0 0.0
    %v69 = vand.u32 %v49, 4294901760
    %70 = vmatpush.msra.mxu0 %v69
    %v71 = vand.u32 %v48, 4294901760
    %72 = vmatpush.msra.mxu0 %v71
    %v73 = vand.u32 %v47, 4294901760
    %74 = vmatpush.msra.mxu0 %v73
    %v75 = vand.u32 %v46, 4294901760
    %76 = vmatpush.msra.mxu0 %v75
    %v77 = vand.u32 %v52, 4294901760
    %v78 = vsub.f32 %v52, %v77
    %v79 = vand.u32 %v78, 4294901760
    %v80 = vsub.f32 %v78, %v79
    %v81 = vand.u32 %v80, 4294901760
    %82 = vmatmul.f32.gmra.mxu0 %v81
    %v83 = vpop.f32.mrf.mxu0
    %v84 = vadd.f32 0.0, %v83
    %v85 = vand.u32 %v55, 4294901760
    %v86 = vsub.f32 %v55, %v85
    %v87 = vand.u32 %v86, 4294901760
    %v88 = vsub.f32 %v86, %v87
    %v89 = vand.u32 %v88, 4294901760
    %90 = vmatmul.f32.gmra.mxu0 %v89
    %v91 = vpop.f32.mrf.mxu0
    %v92 = vadd.f32 0.0, %v91
    %93 = vdwg.mxu0
    %94 = vmatpush.msra.mxu0 0.0
    %95 = vmatpush.msra.mxu0 0.0
    %96 = vmatpush.msra.mxu0 0.0
    %97 = vmatpush.msra.mxu0 0.0
    %98 = vmatpush.msra.mxu0 0.0
    %99 = vmatpush.msra.mxu0 0.0
    %100 = vmatpush.msra.mxu0 0.0
    %101 = vmatpush.msra.mxu0 0.0
    %102 = vmatpush.msra.mxu0 0.0
    %103 = vmatpush.msra.mxu0 0.0
    %104 = vmatpush.msra.mxu0 0.0
    %105 = vmatpush.msra.mxu0 0.0
    %v106 = vand.u32 %v49, 4294901760
    %v107 = vsub.f32 %v49, %v106
    %v108 = vand.u32 %v107, 4294901760
    %v109 = vsub.f32 %v107, %v108
    %v110 = vand.u32 %v109, 4294901760
    %111 = vmatpush.msra.mxu0 %v110
    %v112 = vand.u32 %v48, 4294901760
    %v113 = vsub.f32 %v48, %v112
    %v114 = vand.u32 %v113, 4294901760
    %v115 = vsub.f32 %v113, %v114
    %v116 = vand.u32 %v115, 4294901760
    %117 = vmatpush.msra.mxu0 %v116
    %v118 = vand.u32 %v47, 4294901760
    %v119 = vsub.f32 %v47, %v118
    %v120 = vand.u32 %v119, 4294901760
    %v121 = vsub.f32 %v119, %v120
    %v122 = vand.u32 %v121, 4294901760
    %123 = vmatpush.msra.mxu0 %v122
    %v124 = vand.u32 %v46, 4294901760
    %v125 = vsub.f32 %v46, %v124
    %v126 = vand.u32 %v125, 4294901760
    %v127 = vsub.f32 %v125, %v126
    %v128 = vand.u32 %v127, 4294901760
    %129 = vmatpush.msra.mxu0 %v128
    %v130 = vand.u32 %v52, 4294901760
    %131 = vmatmul.f32.gmra.mxu0 %v130
    %v132 = vpop.f32.mrf.mxu0
    %v133 = vadd.f32 %v84, %v132
    %v134 = vand.u32 %v55, 4294901760
    %135 = vmatmul.f32.gmra.mxu0 %v134
    %v136 = vpop.f32.mrf.mxu0
    %v137 = vadd.f32 %v92, %v136
    %138 = vdwg.mxu0
    %139 = vmatpush.msra.mxu0 0.0
    %140 = vmatpush.msra.mxu0 0.0
    %141 = vmatpush.msra.mxu0 0.0
    %142 = vmatpush.msra.mxu0 0.0
    %143 = vmatpush.msra.mxu0 0.0
    %144 = vmatpush.msra.mxu0 0.0
    %145 = vmatpush.msra.mxu0 0.0
    %146 = vmatpush.msra.mxu0 0.0
    %147 = vmatpush.msra.mxu0 0.0
    %148 = vmatpush.msra.mxu0 0.0
    %149 = vmatpush.msra.mxu0 0.0
    %150 = vmatpush.msra.mxu0 0.0
    %v151 = vand.u32 %v49, 4294901760
    %v152 = vsub.f32 %v49, %v151
    %153 = vmatpush.msra.mxu0 %v152
    %v154 = vand.u32 %v48, 4294901760
    %v155 = vsub.f32 %v48, %v154
    %156 = vmatpush.msra.mxu0 %v155
    %v157 = vand.u32 %v47, 4294901760
    %v158 = vsub.f32 %v47, %v157
    %159 = vmatpush.msra.mxu0 %v158
    %v160 = vand.u32 %v46, 4294901760
    %v161 = vsub.f32 %v46, %v160
    %162 = vmatpush.msra.mxu0 %v161
    %v163 = vand.u32 %v52, 4294901760
    %v164 = vsub.f32 %v52, %v163
    %165 = vmatmul.f32.gmra.mxu0 %v164
    %v166 = vpop.f32.mrf.mxu0
    %v167 = vadd.f32 %v133, %v166
    %v168 = vand.u32 %v55, 4294901760
    %v169 = vsub.f32 %v55, %v168
    %170 = vmatmul.f32.gmra.mxu0 %v169
    %v171 = vpop.f32.mrf.mxu0
    %v172 = vadd.f32 %v137, %v171
    %173 = vdwg.mxu0
    %174 = vmatpush.msra.mxu0 0.0
    %175 = vmatpush.msra.mxu0 0.0
    %176 = vmatpush.msra.mxu0 0.0
    %177 = vmatpush.msra.mxu0 0.0
    %178 = vmatpush.msra.mxu0 0.0
    %179 = vmatpush.msra.mxu0 0.0
    %180 = vmatpush.msra.mxu0 0.0
    %181 = vmatpush.msra.mxu0 0.0
    %182 = vmatpush.msra.mxu0 0.0
    %183 = vmatpush.msra.mxu0 0.0
    %184 = vmatpush.msra.mxu0 0.0
    %185 = vmatpush.msra.mxu0 0.0
    %v186 = vand.u32 %v49, 4294901760
    %187 = vmatpush.msra.mxu0 %v186
    %v188 = vand.u32 %v48, 4294901760
    %189 = vmatpush.msra.mxu0 %v188
    %v190 = vand.u32 %v47, 4294901760
    %191 = vmatpush.msra.mxu0 %v190
    %v192 = vand.u32 %v46, 4294901760
    %193 = vmatpush.msra.mxu0 %v192
    %v194 = vand.u32 %v52, 4294901760
    %v195 = vsub.f32 %v52, %v194
    %v196 = vand.u32 %v195, 4294901760
    %197 = vmatmul.f32.gmra.mxu0 %v196
    %v198 = vpop.f32.mrf.mxu0
    %v199 = vadd.f32 %v167, %v198
    %v200 = vand.u32 %v55, 4294901760
    %v201 = vsub.f32 %v55, %v200
    %v202 = vand.u32 %v201, 4294901760
    %203 = vmatmul.f32.gmra.mxu0 %v202
    %v204 = vpop.f32.mrf.mxu0
    %v205 = vadd.f32 %v172, %v204
    %206 = vdwg.mxu0
    %207 = vmatpush.msra.mxu0 0.0
    %208 = vmatpush.msra.mxu0 0.0
    %209 = vmatpush.msra.mxu0 0.0
    %210 = vmatpush.msra.mxu0 0.0
    %211 = vmatpush.msra.mxu0 0.0
    %212 = vmatpush.msra.mxu0 0.0
    %213 = vmatpush.msra.mxu0 0.0
    %214 = vmatpush.msra.mxu0 0.0
    %215 = vmatpush.msra.mxu0 0.0
    %216 = vmatpush.msra.mxu0 0.0
    %217 = vmatpush.msra.mxu0 0.0
    %218 = vmatpush.msra.mxu0 0.0
    %v219 = vand.u32 %v49, 4294901760
    %v220 = vsub.f32 %v49, %v219
    %v221 = vand.u32 %v220, 4294901760
    %222 = vmatpush.msra.mxu0 %v221
    %v223 = vand.u32 %v48, 4294901760
    %v224 = vsub.f32 %v48, %v223
    %v225 = vand.u32 %v224, 4294901760
    %226 = vmatpush.msra.mxu0 %v225
    %v227 = vand.u32 %v47, 4294901760
    %v228 = vsub.f32 %v47, %v227
    %v229 = vand.u32 %v228, 4294901760
    %230 = vmatpush.msra.mxu0 %v229
    %v231 = vand.u32 %v46, 4294901760
    %v232 = vsub.f32 %v46, %v231
    %v233 = vand.u32 %v232, 4294901760
    %234 = vmatpush.msra.mxu0 %v233
    %v235 = vand.u32 %v52, 4294901760
    %236 = vmatmul.f32.gmra.mxu0 %v235
    %v237 = vpop.f32.mrf.mxu0
    %v238 = vadd.f32 %v199, %v237
    %v239 = vand.u32 %v55, 4294901760
    %240 = vmatmul.f32.gmra.mxu0 %v239
    %v241 = vpop.f32.mrf.mxu0
    %v242 = vadd.f32 %v205, %v241
    %243 = vdwg.mxu0
    %244 = vmatpush.msra.mxu0 0.0
    %245 = vmatpush.msra.mxu0 0.0
    %246 = vmatpush.msra.mxu0 0.0
    %247 = vmatpush.msra.mxu0 0.0
    %248 = vmatpush.msra.mxu0 0.0
    %249 = vmatpush.msra.mxu0 0.0
    %250 = vmatpush.msra.mxu0 0.0
    %251 = vmatpush.msra.mxu0 0.0
    %252 = vmatpush.msra.mxu0 0.0
    %253 = vmatpush.msra.mxu0 0.0
    %254 = vmatpush.msra.mxu0 0.0
    %255 = vmatpush.msra.mxu0 0.0
    %v256 = vand.u32 %v49, 4294901760
    %257 = vmatpush.msra.mxu0 %v256
    %v258 = vand.u32 %v48, 4294901760
    %259 = vmatpush.msra.mxu0 %v258
    %v260 = vand.u32 %v47, 4294901760
    %261 = vmatpush.msra.mxu0 %v260
    %v262 = vand.u32 %v46, 4294901760
    %263 = vmatpush.msra.mxu0 %v262
    %v264 = vand.u32 %v52, 4294901760
    %265 = vmatmul.f32.gmra.mxu0 %v264
    %v266 = vpop.f32.mrf.mxu0
    %v267 = vadd.f32 %v238, %v266
    %v268 = vand.u32 %v55, 4294901760
    %269 = vmatmul.f32.gmra.mxu0 %v268
    %v270 = vpop.f32.mrf.mxu0
    %v271 = vadd.f32 %v242, %v270
    %272 = vdwg.mxu0
    %vm273 = vcmask 785408
    %274 = vst.msk [vmem:[#allocation7] sm:$0xff] %vm273, %v267
    %275 = vst.msk [vmem:[#allocation7 + $0x8] sm:$0xff] %vm273, %v271
    // Predicated region
    $region18: #{tpu_custom_call.1} parent=1 // pred_check
      _
    $region19: #{tpu_custom_call.1} parent=1 // pred_check_branch
      %277 = sbr.rel (0) target = $region21
    $region20: #{tpu_custom_call.1} parent=1 // pred_region
      %279 = vsyncadd [#allocation4], 0
      %s280 = sshll.u32 [#allocation7], 4
      %s281 = int_to_ptr.vmem [resolvable:$true] %s280
      %s282 = sshll.u32 %s2, 4
      %s283 = int_to_ptr.hbm [resolvable:$true] %s282
      %288 = dma.vmem_to_hbm [thread:$0]  %s281, 256, %s283, [#allocation4], 128, 128, 8
    $region21: #{tpu_custom_call.1} parent=1 // pred_fallthru
      _
    // Predicated region
    $region22: #{tpu_custom_call.1} parent=1 // pred_check
      _
    $region23: #{tpu_custom_call.1} parent=1 // pred_check_branch
      %290 = sbr.rel (0) target = $region25
    $region24: #{tpu_custom_call.1} parent=1 // pred_region
      %292 = dma.done [#allocation4], 256
    $region25: #{tpu_custom_call.1} parent=1 // pred_fallthru
      _
    %293 = vsyncpa [#allocation3], 1
    %294 = vsyncpa [#allocation6], 1
    %295 = vsyncpa [#allocation4], 1

</llo_original>
